<compile_context>
chip_gen: v7x
topology: tpu7x:2x2x1
jax: 0.10.0
libtpu: 0.0.40
codegen_flags: <defaults>
</compile_context>

<pallas_src>
import functools

import jax
import jax.numpy as jnp
from jax import lax
from jax.experimental import pallas as pl
from jax.experimental.pallas import tpu as pltpu

LANE = 128
_VMEM_LIMIT = 48 * 1024 * 1024  # conservative for v7x's 64 MiB VMEM


def _round_up(x, m):
    return ((x + m - 1) // m) * m


def _pad2(a, rows, cols):
    return jnp.pad(a, ((0, rows - a.shape[0]), (0, cols - a.shape[1])))


def _project_kernel(x_ref, wt_ref, asrc_ref, adst_ref, h_ref, s_ref, d_ref):
    """h = x @ W^T; s_j = att_src.h_j; d_i = att_dst.h_i (one tile of rows)."""
    h = jnp.dot(x_ref[...].astype(jnp.bfloat16),
                wt_ref[...].astype(jnp.bfloat16),
                preferred_element_type=jnp.float32)          # (TM, Fo) on MXU
    # VPU multiply + XLU row-reduce instead of 1-wide MXU matmuls.
    s_ref[...] = jnp.sum(h * asrc_ref[...], axis=-1, keepdims=True)
    d_ref[...] = jnp.sum(h * adst_ref[...], axis=-1, keepdims=True)
    h_ref[...] = h.astype(jnp.bfloat16)


def _attn_kernel(d_ref, s_ref, mask_ref, h_ref, bias_ref, out_ref, *, apply_post):
    """Masked softmax over sources + aggregation for one tile of destination rows."""
    e0 = d_ref[...] + s_ref[...]                 # (TM, N) outer sum via broadcast
    e = jnp.maximum(e0, 0.2 * e0)                # LeakyReLU(negative_slope=0.2)
    e = e + mask_ref[...].astype(jnp.float32)    # additive mask: 0 or -1e30
    m = jnp.max(e, axis=-1, keepdims=True)
    p = jnp.exp(e - m)                           # masked entries underflow to 0
    denom = jnp.sum(p, axis=-1, keepdims=True)
    out = jnp.dot(p.astype(jnp.bfloat16), h_ref[...],
                  preferred_element_type=jnp.float32)        # (TM, Fo) on MXU
    out = out * pl.reciprocal(denom, approx=True) + bias_ref[...]
    if apply_post:
        out = jnp.maximum(out, 0.0)                          # ReLU
        ssq = jnp.sum(out * out, axis=-1, keepdims=True)     # L2 normalize (rsqrt)
        out = out * lax.rsqrt(jnp.maximum(ssq, 1e-24))
        # dropout: identity in eval mode
    out_ref[...] = out


def _gat_layer(xp, mask_bias, wt_p, asrc_p, adst_p, bias_p, *, tm, apply_post):
    n_pad, fin_pad = xp.shape
    fo_pad = wt_p.shape[1]
    grid = (n_pad // tm,)
    cparams = pltpu.CompilerParams(dimension_semantics=("parallel",),
                                   vmem_limit_bytes=_VMEM_LIMIT)

    h_bf, s_col, d_col = pl.pallas_call(
        _project_kernel,
        out_shape=(jax.ShapeDtypeStruct((n_pad, fo_pad), jnp.bfloat16),
                   jax.ShapeDtypeStruct((n_pad, 1), jnp.float32),
                   jax.ShapeDtypeStruct((n_pad, 1), jnp.float32)),
        grid=grid,
        in_specs=[pl.BlockSpec((tm, fin_pad), lambda i: (i, 0)),
                  pl.BlockSpec((fin_pad, fo_pad), lambda i: (0, 0)),
                  pl.BlockSpec((1, fo_pad), lambda i: (0, 0)),
                  pl.BlockSpec((1, fo_pad), lambda i: (0, 0))],
        out_specs=(pl.BlockSpec((tm, fo_pad), lambda i: (i, 0)),
                   pl.BlockSpec((tm, 1), lambda i: (i, 0)),
                   pl.BlockSpec((tm, 1), lambda i: (i, 0))),
        compiler_params=cparams,
    )(xp, wt_p, asrc_p, adst_p)

    # Tiny (N,1)->(1,N) relayout done once per layer in plain XLA (outside kernel).
    s_row = s_col.reshape(1, n_pad)

    out = pl.pallas_call(
        functools.partial(_attn_kernel, apply_post=apply_post),
        out_shape=jax.ShapeDtypeStruct((n_pad, fo_pad), jnp.float32),
        grid=grid,
        in_specs=[pl.BlockSpec((tm, 1), lambda i: (i, 0)),
                  pl.BlockSpec((1, n_pad), lambda i: (0, 0)),
                  pl.BlockSpec((tm, n_pad), lambda i: (i, 0)),
                  pl.BlockSpec((n_pad, fo_pad), lambda i: (0, 0)),
                  pl.BlockSpec((1, fo_pad), lambda i: (0, 0))],
        out_specs=pl.BlockSpec((tm, fo_pad), lambda i: (i, 0)),
        compiler_params=cparams,
    )(d_col, s_row, mask_bias, h_bf, bias_p)
    return out


def build_mask_bias(edge_index, num_nodes, n_pad):
    """Additive attention mask (bf16): 0 where edge j->i exists (incl. self loops), else -1e30."""
    del num_nodes
    src = edge_index[0]
    dst = edge_index[1]
    adj = jnp.zeros((n_pad, n_pad), jnp.float32)
    adj = adj.at[dst, src].set(1.0)
    adj = jnp.maximum(adj, jnp.eye(n_pad, dtype=jnp.float32))  # self loops (also for pad rows)
    return ((adj - 1.0) * 1e30).astype(jnp.bfloat16)


def init_gat_encoder_params(key, in_channels, out_channels, n_layers=2):
    """Deterministic parameter init matching GATConv(in, out, heads=1) shapes."""
    params = []
    fin = in_channels
    for _ in range(n_layers):
        key, kw, ks, kd, kb = jax.random.split(key, 5)
        scale = 1.0 / jnp.sqrt(jnp.float32(fin))
        w = jax.random.normal(kw, (out_channels, fin), jnp.float32) * scale
        a_src = jax.random.normal(ks, (1, out_channels), jnp.float32) * 0.1
        a_dst = jax.random.normal(kd, (1, out_channels), jnp.float32) * 0.1
        bias = jax.random.normal(kb, (1, out_channels), jnp.float32) * 0.01
        params.append((w.T, a_src, a_dst, bias))  # store W^T (Fin, Fo) for the kernel
        fin = out_channels
    return params


def gat_encoder_forward(x, edge_index, edge_feature, params):
    # edge_feature is accepted but unused, matching the reference forward.
    del edge_feature
    n, fin = x.shape
    fo = params[0][0].shape[1]

    # Row tile: 256 for large graphs (fits v7x VMEM with double-buffered slabs),
    # full (rounded to 16 for bf16 sublane packing) for small graphs.
    tm = 256 if n > 256 else _round_up(max(n, 8), 16)
    n_pad = _round_up(n, tm)
    fin_pad = _round_up(fin, LANE)
    fo_pad = _round_up(fo, LANE)

    mask_bias = build_mask_bias(edge_index, n, n_pad)
    xp = _pad2(x.astype(jnp.float32), n_pad, fin_pad)

    cur_fin_pad = fin_pad
    for li, (wt, a_src, a_dst, bias) in enumerate(params):
        wt_p = _pad2(wt, cur_fin_pad, fo_pad)
        asrc_p = _pad2(a_src, 1, fo_pad)
        adst_p = _pad2(a_dst, 1, fo_pad)
        bias_p = _pad2(bias, 1, fo_pad)
        apply_post = li < len(params) - 1
        xp = _gat_layer(xp, mask_bias, wt_p, asrc_p, adst_p, bias_p,
                        tm=tm, apply_post=apply_post)
        cur_fin_pad = fo_pad

    return xp[:n, :fo]


if __name__ == "__main__":
    key = jax.random.PRNGKey(0)

    num_nodes = 16
    in_channels = 8
    out_channels = 32
    num_edges = 40
    n_layers = 2

    k_x, k_src, k_dst, k_ef, k_p = jax.random.split(key, 5)
    x = jax.random.normal(k_x, (num_nodes, in_channels), jnp.float32)
    src = jax.random.randint(k_src, (num_edges,), 0, num_nodes)
    dst = jax.random.randint(k_dst, (num_edges,), 0, num_nodes)
    edge_index = jnp.stack([src, dst], axis=0)                 # (2, E)
    edge_feature = jax.random.normal(k_ef, (num_edges, 4), jnp.float32)

    params = init_gat_encoder_params(k_p, in_channels, out_channels, n_layers)

    out = gat_encoder_forward(x, edge_index, edge_feature, params)
    out = jax.block_until_ready(out)
    assert out.shape == (num_nodes, out_channels)
    assert bool(jnp.all(jnp.isfinite(out)))
    print("KERNEL_OK")
</pallas_src>

<mosaic_0001>
module attributes {stable_mosaic.version = 11 : i64} {
  func.func @_project_kernel(%arg0: i32, %arg1: memref<16x128xf32, #tpu.memory_space<vmem>>, %arg2: memref<128x128xf32, #tpu.memory_space<vmem>>, %arg3: memref<1x128xf32, #tpu.memory_space<vmem>>, %arg4: memref<1x128xf32, #tpu.memory_space<vmem>>, %arg5: memref<16x128xbf16, #tpu.memory_space<vmem>>, %arg6: memref<16x1xf32, #tpu.memory_space<vmem>>, %arg7: memref<16x1xf32, #tpu.memory_space<vmem>>) attributes {dimension_semantics = [#tpu.dimension_semantics<parallel>], iteration_bounds = array<i64: 1>, scalar_prefetch = 0 : i64, scratch_operands = 0 : i64, tpu.core_type = #tpu.core_type<tc>, window_params = [{transform_indices = @transform_0, window_bounds = array<i64: 16, 128>}, {pipeline_mode = #tpu.pipeline_mode<synchronous>, transform_indices = @transform_1, window_bounds = array<i64: 128, 128>}, {pipeline_mode = #tpu.pipeline_mode<synchronous>, transform_indices = @transform_2, window_bounds = array<i64: 1, 128>}, {pipeline_mode = #tpu.pipeline_mode<synchronous>, transform_indices = @transform_3, window_bounds = array<i64: 1, 128>}, {transform_indices = @transform_4, window_bounds = array<i64: 16, 128>}, {transform_indices = @transform_5, window_bounds = array<i64: 16, 1>}, {transform_indices = @transform_6, window_bounds = array<i64: 16, 1>}]} {
    %c0 = arith.constant 0 : index
    %c0_0 = arith.constant 0 : index
    %0 = vector.load %arg1[%c0, %c0_0] : memref<16x128xf32, #tpu.memory_space<vmem>>, vector<16x128xf32>
    %1 = arith.truncf %0 : vector<16x128xf32> to vector<16x128xbf16>
    %c0_1 = arith.constant 0 : index
    %c0_2 = arith.constant 0 : index
    %2 = vector.load %arg2[%c0_1, %c0_2] : memref<128x128xf32, #tpu.memory_space<vmem>>, vector<128x128xf32>
    %3 = arith.truncf %2 : vector<128x128xf32> to vector<128x128xbf16>
    %cst = arith.constant dense<0.000000e+00> : vector<16x128xf32>
    %4 = tpu.matmul %1, %3, %cst {dimension_numbers = #tpu.dot_dimension_numbers<[1], [0], [0], [1], [0, 0, 1, 1], [], []>} : vector<16x128xbf16>, vector<128x128xbf16>, vector<16x128xf32> -> vector<16x128xf32>
    %c0_3 = arith.constant 0 : index
    %c0_4 = arith.constant 0 : index
    %5 = vector.load %arg3[%c0_3, %c0_4] : memref<1x128xf32, #tpu.memory_space<vmem>>, vector<1x128xf32>
    %6 = vector.broadcast %5 : vector<1x128xf32> to vector<16x128xf32>
    %7 = arith.mulf %4, %6 : vector<16x128xf32>
    %cst_5 = arith.constant dense<0.000000e+00> : vector<16xf32>
    %8 = vector.multi_reduction <add>, %7, %cst_5 [1] : vector<16x128xf32> to vector<16xf32>
    %9 = vector.shape_cast %8 : vector<16xf32> to vector<16x1xf32>
    %c0_6 = arith.constant 0 : index
    %c0_7 = arith.constant 0 : index
    %10 = vector.load %arg6[%c0_6, %c0_7] : memref<16x1xf32, #tpu.memory_space<vmem>>, vector<16x1xf32>
    tpu.vector_store %arg6[%c0_6, %c0_7], %9 {strides = array<i32>} : memref<16x1xf32, #tpu.memory_space<vmem>>, vector<16x1xf32>,
    %c0_8 = arith.constant 0 : index
    %c0_9 = arith.constant 0 : index
    %11 = vector.load %arg4[%c0_8, %c0_9] : memref<1x128xf32, #tpu.memory_space<vmem>>, vector<1x128xf32>
    %12 = vector.broadcast %11 : vector<1x128xf32> to vector<16x128xf32>
    %13 = arith.mulf %4, %12 : vector<16x128xf32>
    %cst_10 = arith.constant dense<0.000000e+00> : vector<16xf32>
    %14 = vector.multi_reduction <add>, %13, %cst_10 [1] : vector<16x128xf32> to vector<16xf32>
    %15 = vector.shape_cast %14 : vector<16xf32> to vector<16x1xf32>
    %c0_11 = arith.constant 0 : index
    %c0_12 = arith.constant 0 : index
    %16 = vector.load %arg7[%c0_11, %c0_12] : memref<16x1xf32, #tpu.memory_space<vmem>>, vector<16x1xf32>
    tpu.vector_store %arg7[%c0_11, %c0_12], %15 {strides = array<i32>} : memref<16x1xf32, #tpu.memory_space<vmem>>, vector<16x1xf32>,
    %17 = arith.truncf %4 : vector<16x128xf32> to vector<16x128xbf16>
    %c0_13 = arith.constant 0 : index
    %c0_14 = arith.constant 0 : index
    %18 = vector.load %arg5[%c0_13, %c0_14] : memref<16x128xbf16, #tpu.memory_space<vmem>>, vector<16x128xbf16>
    tpu.vector_store %arg5[%c0_13, %c0_14], %17 {strides = array<i32>} : memref<16x128xbf16, #tpu.memory_space<vmem>>, vector<16x128xbf16>,
    return
  }
  func.func @transform_0(%arg0: i32) -> (i32, i32) {
    %c0_i32 = arith.constant 0 : i32
    %c0_i32_0 = arith.constant 0 : i32
    return %arg0, %c0_i32 : i32, i32
  }
  func.func @transform_1(%arg0: i32) -> (i32, i32) {
    %c0_i32 = arith.constant 0 : i32
    %c0_i32_0 = arith.constant 0 : i32
    %c0_i32_1 = arith.constant 0 : i32
    return %c0_i32, %c0_i32_0 : i32, i32
  }
  func.func @transform_2(%arg0: i32) -> (i32, i32) {
    %c0_i32 = arith.constant 0 : i32
    %c0_i32_0 = arith.constant 0 : i32
    %c0_i32_1 = arith.constant 0 : i32
    return %c0_i32, %c0_i32_0 : i32, i32
  }
  func.func @transform_3(%arg0: i32) -> (i32, i32) {
    %c0_i32 = arith.constant 0 : i32
    %c0_i32_0 = arith.constant 0 : i32
    %c0_i32_1 = arith.constant 0 : i32
    return %c0_i32, %c0_i32_0 : i32, i32
  }
  func.func @transform_4(%arg0: i32) -> (i32, i32) {
    %c0_i32 = arith.constant 0 : i32
    %c0_i32_0 = arith.constant 0 : i32
    return %arg0, %c0_i32 : i32, i32
  }
  func.func @transform_5(%arg0: i32) -> (i32, i32) {
    %c0_i32 = arith.constant 0 : i32
    %c0_i32_0 = arith.constant 0 : i32
    return %arg0, %c0_i32 : i32, i32
  }
  func.func @transform_6(%arg0: i32) -> (i32, i32) {
    %c0_i32 = arith.constant 0 : i32
    %c0_i32_0 = arith.constant 0 : i32
    return %arg0, %c0_i32 : i32, i32
  }
}

</mosaic_0001>

<llo_original>
// kernel: tpu_custom_call.1
$region0: #{tpu_custom_call.1}
  #allocation0 [shape = 'u32[]', space=smem, size = 0x4, offset = 0x4, fixed_abs, tag = 'smem constant byte address 0x4 - core index']
  #allocation1 [shape = 'u32[144,128]{1,0:T(1,128)}', space=vmem, size = 0x12000, scoped, tag = 'internal scratch']
  %s0 = inlined_call_operand.hbm [shape: f32[16,128], index: 0, kind: input, shape index: {}]
  %s1 = inlined_call_operand.hbm [shape: f32[128,128], index: 1, kind: input, shape index: {}]
  %s2 = inlined_call_operand.vmem [shape: f32[1,128], index: 2, kind: input, shape index: {}]
  %s3 = inlined_call_operand.vmem [shape: f32[1,128], index: 3, kind: input, shape index: {}]
  %s4 = inlined_call_operand.hbm [shape: bf16[16,128], index: 4, kind: output, shape index: {0}]
  %s5 = inlined_call_operand.vmem [shape: f32[16,1], index: 5, kind: output, shape index: {1}]
  %s6 = inlined_call_operand.vmem [shape: f32[16,1], index: 6, kind: output, shape index: {2}]
  %7 = xla_tuple %s4, %s5, %s6
  %s8 = sld [smem:[#allocation0]]
  $region50: #{tpu_custom_call.1} parent=0
    _
  %s10 = ssub.s32 1, %s8
  %s11 = scalar_select 0, %s10, %s8
  $region1: #{tpu_custom_call.1} parent=0
    #allocation2 [shape = 'u8[8192]{0}', space=vmem, size = 0x2000, scoped, tag = 'input window, operand 0, single buffered']
    #allocation3 [shape = 's32[1]{0}', space=sflag, size = 0x4, scoped, tag = 'scoped memory for tpu_custom_call.1']
    #allocation4 [shape = 's32[1]{0}', space=sflag, size = 0x4, scoped, tag = 'scoped memory for tpu_custom_call.1']
    #allocation5 [shape = 'u8[65536]{0}', space=vmem, size = 0x10000, scoped, tag = 'input window, operand 1, single buffered']
    #allocation6 [shape = 's32[1]{0}', space=sflag, size = 0x4, scoped, tag = 'scoped memory for tpu_custom_call.1']
    #allocation7 [shape = 'u8[4096]{0}', space=vmem, size = 0x1000, scoped, tag = 'output window, operand 0, single buffered']
    %12 = vsyncpa [#allocation3], 0
    %13 = vsyncpa [#allocation6], 0
    %14 = vsyncpa [#allocation4], 0
    // Predicated region
    $region2: #{tpu_custom_call.1} parent=1 // pred_check
      _
    $region3: #{tpu_custom_call.1} parent=1 // pred_check_branch
      %16 = sbr.rel (0) target = $region5
    $region4: #{tpu_custom_call.1} parent=1 // pred_region
      %s18 = ssub.s32 256, 256
      %19 = vsyncadd [#allocation3], %s18
      %s20 = sshll.u32 [#allocation2], 4
      %s21 = int_to_ptr.vmem [resolvable:$true] %s20
      %26 = dma.hbm_to_vmem [thread:$0]  %s0, 256, %s21, [#allocation3], 128, 128, 8
    $region5: #{tpu_custom_call.1} parent=1 // pred_fallthru
      _
    // Predicated region
    $region6: #{tpu_custom_call.1} parent=1 // pred_check
      _
    $region7: #{tpu_custom_call.1} parent=1 // pred_check_branch
      %28 = sbr.rel (0) target = $region9
    $region8: #{tpu_custom_call.1} parent=1 // pred_region
      %s30 = ssub.s32 2048, 2048
      %31 = vsyncadd [#allocation6], %s30
      %s32 = sshll.u32 [#allocation5], 4
      %s33 = int_to_ptr.vmem [resolvable:$true] %s32
      %38 = dma.hbm_to_vmem [thread:$0]  %s1, 2048, %s33, [#allocation6], 128, 128, 8
    $region9: #{tpu_custom_call.1} parent=1 // pred_fallthru
      _
    // Predicated region
    $region10: #{tpu_custom_call.1} parent=1 // pred_check
      _
    $region11: #{tpu_custom_call.1} parent=1 // pred_check_branch
      %40 = sbr.rel (0) target = $region13
    $region12: #{tpu_custom_call.1} parent=1 // pred_region
      _
    $region13: #{tpu_custom_call.1} parent=1 // pred_fallthru
      _
    // Predicated region
    $region14: #{tpu_custom_call.1} parent=1 // pred_check
      _
    $region15: #{tpu_custom_call.1} parent=1 // pred_check_branch
      %42 = sbr.rel (0) target = $region17
    $region16: #{tpu_custom_call.1} parent=1 // pred_region
      _
    $region17: #{tpu_custom_call.1} parent=1 // pred_fallthru
      _
    // Predicated region
    $region18: #{tpu_custom_call.1} parent=1 // pred_check
      _
    $region19: #{tpu_custom_call.1} parent=1 // pred_check_branch
      %44 = sbr.rel (0) target = $region21
    $region20: #{tpu_custom_call.1} parent=1 // pred_region
      %45 = dma.done [#allocation3], 256
    $region21: #{tpu_custom_call.1} parent=1 // pred_fallthru
      _
    // Predicated region
    $region22: #{tpu_custom_call.1} parent=1 // pred_check
      _
    $region23: #{tpu_custom_call.1} parent=1 // pred_check_branch
      %47 = sbr.rel (0) target = $region25
    $region24: #{tpu_custom_call.1} parent=1 // pred_region
      %48 = dma.done [#allocation6], 2048
    $region25: #{tpu_custom_call.1} parent=1 // pred_fallthru
      _
    %v50 = vld [vmem:[#allocation2] sm:$0xff]
    %v51 = vld [vmem:[#allocation2 + $0x8] sm:$0xff]
    %v52 = vpack.c.bf16 %v51, %v50
    %v53 = vld [vmem:[#allocation5] sm:$0xff]
    %v54 = vld [vmem:[#allocation5 + $0x8] sm:$0xff]
    %v55 = vld [vmem:[#allocation5 + $0x10] sm:$0xff]
    %v56 = vld [vmem:[#allocation5 + $0x18] sm:$0xff]
    %v57 = vld [vmem:[#allocation5 + $0x20] sm:$0xff]
    %v58 = vld [vmem:[#allocation5 + $0x28] sm:$0xff]
    %v59 = vld [vmem:[#allocation5 + $0x30] sm:$0xff]
    %v60 = vld [vmem:[#allocation5 + $0x38] sm:$0xff]
    %v61 = vld [vmem:[#allocation5 + $0x40] sm:$0xff]
    %v62 = vld [vmem:[#allocation5 + $0x48] sm:$0xff]
    %v63 = vld [vmem:[#allocation5 + $0x50] sm:$0xff]
    %v64 = vld [vmem:[#allocation5 + $0x58] sm:$0xff]
    %v65 = vld [vmem:[#allocation5 + $0x60] sm:$0xff]
    %v66 = vld [vmem:[#allocation5 + $0x68] sm:$0xff]
    %v67 = vld [vmem:[#allocation5 + $0x70] sm:$0xff]
    %v68 = vld [vmem:[#allocation5 + $0x78] sm:$0xff]
    %v69 = vpack.c.bf16 %v54, %v53
    %v70 = vpack.c.bf16 %v56, %v55
    %v71 = vpack.c.bf16 %v58, %v57
    %v72 = vpack.c.bf16 %v60, %v59
    %v73 = vpack.c.bf16 %v62, %v61
    %v74 = vpack.c.bf16 %v64, %v63
    %v75 = vpack.c.bf16 %v66, %v65
    %v76 = vpack.c.bf16 %v68, %v67
    %77 = vmatprep.subr.bf16.mxu0 0
    %78 = vmatpush1.bf16.msra.mxu0 %v69
    %79 = vmatprep.subr.bf16.mxu0 0
    %80 = vmatpush1.bf16.msra.mxu0 %v70
    %81 = vmatprep.subr.bf16.mxu0 0
    %82 = vmatpush1.bf16.msra.mxu0 %v71
    %83 = vmatprep.subr.bf16.mxu0 0
    %84 = vmatpush1.bf16.msra.mxu0 %v72
    %85 = vmatprep.subr.bf16.mxu0 0
    %86 = vmatpush1.bf16.msra.mxu0 %v73
    %87 = vmatprep.subr.bf16.mxu0 0
    %88 = vmatpush1.bf16.msra.mxu0 %v74
    %89 = vmatprep.subr.bf16.mxu0 0
    %90 = vmatpush1.bf16.msra.mxu0 %v75
    %91 = vmatprep.subr.bf16.mxu0 0
    %92 = vmatpush1.bf16.msra.mxu0 %v76
    %93 = vmatprep.subr.bf16.mxu0 0
    %94 = vmatpush1.bf16.msra.mxu0 0
    %95 = vmatprep.subr.bf16.mxu0 0
    %96 = vmatpush1.bf16.msra.mxu0 0
    %97 = vmatprep.subr.bf16.mxu0 0
    %98 = vmatpush1.bf16.msra.mxu0 0
    %99 = vmatprep.subr.bf16.mxu0 0
    %100 = vmatpush1.bf16.msra.mxu0 0
    %101 = vmatprep.subr.bf16.mxu0 0
    %102 = vmatpush1.bf16.msra.mxu0 0
    %103 = vmatprep.subr.bf16.mxu0 0
    %104 = vmatpush1.bf16.msra.mxu0 0
    %105 = vmatprep.subr.bf16.mxu0 0
    %106 = vmatpush1.bf16.msra.mxu0 0
    %107 = vmatprep.subr.bf16.mxu0 0
    %108 = vmatpush1.bf16.msra.mxu0 0
    %109 = vmatprep.mubr.bf16.mxu0 0
    %110 = vmatmul.mubr.bf16.gmra.mrb[0].mxu0 %v52
    %v111 = vpop.f32.mrb[0].mxu0
    %v112 = vadd.f32 0.0, %v111
    %v113 = vpop.f32.mrb[0].mxu0
    %v114 = vpop.f32.mrb[0].mxu0
    %v115 = vadd.f32 0.0, %v114
    %v116 = vpop.f32.mrb[0].mxu0
    %117 = vdwg.mxu0
    %v118 = vld [vmem:[%s2] sm:$0x1]
    %v120 = vlaneseq
    %v121 = vshrl.u32 %v120, 7
    %v122 = vsub.s32 0, %v121
    %v123 = vrot.slane %v118, %v122
    %v125 = vmul.f32 %v112, %v123
    %v126 = vmul.f32 %v115, %v123
    %127 = vadd.xlane.f32.xlu0 %v125
    %v128 = vpop.xlane.xlu0 %127
    %129 = vadd.xlane.f32.xlu0 %v126
    %v130 = vpop.xlane.xlu0 %129
    %vm131 = vcmask 7168
    %132 = vst.msk [vmem:[%s5] sm:$0xff] %vm131, %v128
    %133 = vst.msk [vmem:[%s5 + $0x8] sm:$0xff] %vm131, %v130
    %v134 = vld [vmem:[%s3] sm:$0x1]
    %v136 = vlaneseq
    %v137 = vshrl.u32 %v136, 7
    %v138 = vsub.s32 0, %v137
    %v139 = vrot.slane %v134, %v138
    %v141 = vmul.f32 %v112, %v139
    %v142 = vmul.f32 %v115, %v139
    %143 = vadd.xlane.f32.xlu0 %v141
    %v144 = vpop.xlane.xlu0 %143
    %145 = vadd.xlane.f32.xlu0 %v142
    %v146 = vpop.xlane.xlu0 %145
    %147 = vst.msk [vmem:[%s6] sm:$0xff] %vm131, %v144
    %148 = vst.msk [vmem:[%s6 + $0x8] sm:$0xff] %vm131, %v146
    %v149 = vpack.c.bf16 %v115, %v112
    %v151 = vunpack.c.l.b16 %v149
    %v152 = vunpack.c.h.b16 %v149
    %v153 = vpack.c.b16 %v151, %v151
    %v154 = vpack.c.b16 %v152, %v152
    %157 = vst [vmem:[#allocation7] sm:$0xf] %v153
    %158 = vst [vmem:[#allocation7 + $0x4] sm:$0xf] %v154
    // Predicated region
    $region26: #{tpu_custom_call.1} parent=1 // pred_check
      _
    $region27: #{tpu_custom_call.1} parent=1 // pred_check_branch
      %160 = sbr.rel (0) target = $region29
    $region28: #{tpu_custom_call.1} parent=1 // pred_region
      %s162 = ssub.s32 128, 128
      %163 = vsyncadd [#allocation4], %s162
      %s164 = sshll.u32 [#allocation7], 4
      %s165 = int_to_ptr.vmem [resolvable:$true] %s164
      %170 = dma.vmem_to_hbm [thread:$0]  %s165, 128, %s4, [#allocation4], 64, 64, 4
    $region29: #{tpu_custom_call.1} parent=1 // pred_fallthru
      _
    // Predicated region
    $region30: #{tpu_custom_call.1} parent=1 // pred_check
      _
    $region31: #{tpu_custom_call.1} parent=1 // pred_check_branch
      %172 = sbr.rel (0) target = $region33
    $region32: #{tpu_custom_call.1} parent=1 // pred_region
      _
    $region33: #{tpu_custom_call.1} parent=1 // pred_fallthru
      _
    // Predicated region
    $region34: #{tpu_custom_call.1} parent=1 // pred_check
      _
    $region35: #{tpu_custom_call.1} parent=1 // pred_check_branch
      %174 = sbr.rel (0) target = $region37
    $region36: #{tpu_custom_call.1} parent=1 // pred_region
      _
    $region37: #{tpu_custom_call.1} parent=1 // pred_fallthru
      _
    // Predicated region
    $region38: #{tpu_custom_call.1} parent=1 // pred_check
      _
    $region39: #{tpu_custom_call.1} parent=1 // pred_check_branch
      %176 = sbr.rel (0) target = $region41
    $region40: #{tpu_custom_call.1} parent=1 // pred_region
      %177 = dma.done [#allocation4], 128
    $region41: #{tpu_custom_call.1} parent=1 // pred_fallthru
      _
    // Predicated region
    $region42: #{tpu_custom_call.1} parent=1 // pred_check
      _
    $region43: #{tpu_custom_call.1} parent=1 // pred_check_branch
      %179 = sbr.rel (0) target = $region45
    $region44: #{tpu_custom_call.1} parent=1 // pred_region
      _
    $region45: #{tpu_custom_call.1} parent=1 // pred_fallthru
      _
    // Predicated region
    $region46: #{tpu_custom_call.1} parent=1 // pred_check
      _
    $region47: #{tpu_custom_call.1} parent=1 // pred_check_branch
      %181 = sbr.rel (0) target = $region49
    $region48: #{tpu_custom_call.1} parent=1 // pred_region
      _
    $region49: #{tpu_custom_call.1} parent=1 // pred_fallthru
      _
    %182 = vsyncpa [#allocation3], 1
    %183 = vsyncpa [#allocation6], 1
    %184 = vsyncpa [#allocation4], 1

</llo_original>
